<compile_context>
chip_gen: v6e
topology: v6e:2x2x1
jax: 0.10.0
libtpu: 0.0.40
codegen_flags: <defaults>
</compile_context>

<pallas_src>
import jax
import jax.numpy as jnp
from jax.experimental import pallas as pl
from jax.experimental.pallas import tpu as pltpu


def _round_up(x, m):
    return ((x + m - 1) // m) * m


def _pad2d(a, rows, cols):
    r, c = a.shape
    if r == rows and c == cols:
        return a
    return jnp.pad(a, ((0, rows - r), (0, cols - c)))


# ---------------------------------------------------------------------------
# Kernel body
# ---------------------------------------------------------------------------
def _mlp_kernel(x_ref, w1_ref, b1_ref, w2_ref, b2_ref, o_ref):
    # In-kernel cast to the MXU dtype (bf16): x streams from HBM exactly once
    # in its native dtype; no separate XLA convert op.
    x = x_ref[...].astype(w1_ref.dtype)                          # [TB, Din_p]
    h = jnp.dot(x, w1_ref[...], preferred_element_type=jnp.float32)
    h = h + b1_ref[...]                                          # [TB, Dh_p] f32
    # LeakyReLU, PyTorch default negative_slope = 0.01 (VPU select).
    h = jnp.where(h > 0, h, jnp.float32(0.01) * h)
    # Second matmul: activation back to the MXU dtype, f32 accumulation.
    o = jnp.dot(h.astype(w2_ref.dtype), w2_ref[...],
                preferred_element_type=jnp.float32)
    o = o + b2_ref[...]                                          # [TB, Dout_p] f32
    o_ref[...] = o.astype(o_ref.dtype)                           # narrow (bf16) store


# ---------------------------------------------------------------------------
# One-time parameter preparation (hoisted out of the per-call forward)
# ---------------------------------------------------------------------------
def prepare_params(w1, b1, w2, b2, *, param_dtype=jnp.bfloat16):
    """Pad feature axes to multiples of 128 and cast weights to the MXU dtype.

    Call ONCE at model-load time.
      w1: [Din, Dh]  (transposed vs. PyTorch Linear's [Dh, Din])
      b1: [Dh]
      w2: [Dh, Dout] (transposed)
      b2: [Dout]
    """
    Din, Dh = w1.shape
    Dout = w2.shape[1]
    Din_p, Dh_p, Dout_p = (_round_up(d, 128) for d in (Din, Dh, Dout))
    w1_p = _pad2d(w1, Din_p, Dh_p).astype(param_dtype)
    w2_p = _pad2d(w2, Dh_p, Dout_p).astype(param_dtype)
    b1_p = _pad2d(b1.reshape(1, Dh), 1, Dh_p).astype(jnp.float32)
    b2_p = _pad2d(b2.reshape(1, Dout), 1, Dout_p).astype(jnp.float32)
    return dict(w1=w1_p, b1=b1_p, w2=w2_p, b2=b2_p,
                dims=(Din, Dh, Dout), pdims=(Din_p, Dh_p, Dout_p))


# ---------------------------------------------------------------------------
# Batch-tile selection (VMEM budgeted, v7x-friendly even grid)
# ---------------------------------------------------------------------------
_VMEM_TILE_BUDGET = 24 << 20   # fits v5e (with raised limit), v6e, v7x (64 MiB phys)


def _select_tile_b(B, Din_p, Dh_p, Dout_p, x_itemsize, tile_b_req):
    # rough VMEM bytes per batch row inside the pipelined kernel
    per_row = (2 * Din_p * x_itemsize      # double-buffered x tile (native dtype)
               + 2 * Dout_p * 2            # double-buffered bf16 output tile
               + Din_p * 2                 # in-kernel bf16 copy of x
               + Dh_p * (4 + 2))           # f32 hidden + bf16 hidden temporaries
    max_rows = max(16, (_VMEM_TILE_BUDGET // per_row) // 16 * 16)
    tile_b = min(max(16, (tile_b_req // 16) * 16), max_rows)
    B16 = _round_up(B, 16)
    if B16 < 32:
        return B16                         # too little work to split
    # Keep the parallel batch grid even and >= 2 so v7x's two TensorCores each
    # get a balanced share of this memory-bound workload.
    n = max(2, pl.cdiv(B16, tile_b))
    if n % 2:
        n += 1
    return _round_up(pl.cdiv(B16, n), 16)


# ---------------------------------------------------------------------------
# Forward pass
# ---------------------------------------------------------------------------
def elephant_rumble_classifier_forward(x, params, *, tile_b=2048,
                                       out_store_dtype=jnp.bfloat16):
    """x: [B, Din] activations; params: output of prepare_params()."""
    B, Din = x.shape
    Din0, Dh, Dout = params["dims"]
    Din_p, Dh_p, Dout_p = params["pdims"]
    assert Din == Din0, "input feature dim does not match prepared params"
    out_dtype = x.dtype

    tb = _select_tile_b(B, Din_p, Dh_p, Dout_p, x.dtype.itemsize, tile_b)
    B_p = _round_up(B, tb)
    grid = (B_p // tb,)

    # x stays in its native dtype; only zero-pad batch / feature axes when
    # needed (no-op copy-free path for already-aligned shapes).
    x_p = _pad2d(x, B_p, Din_p)

    w1_p, b1_p, w2_p, b2_p = params["w1"], params["b1"], params["w2"], params["b2"]

    # ---- advisory cost estimate --------------------------------------------
    flops = 2 * B_p * Din_p * Dh_p + 2 * B_p * Dh_p * Dout_p
    bytes_accessed = (
        x_p.size * x_p.dtype.itemsize
        + w1_p.size * w1_p.dtype.itemsize
        + w2_p.size * w2_p.dtype.itemsize
        + b1_p.size * b1_p.dtype.itemsize
        + b2_p.size * b2_p.dtype.itemsize
        + B_p * Dout_p * jnp.dtype(out_store_dtype).itemsize
    )

    # ---- explicit VMEM limit (v5e's default scoped limit is only 16 MiB) ----
    vmem_need = (2 * tb * Din_p * x.dtype.itemsize
                 + 2 * tb * Dout_p * 2
                 + tb * (Din_p * 2 + Dh_p * 6)
                 + 2 * (w1_p.size * w1_p.dtype.itemsize
                        + w2_p.size * w2_p.dtype.itemsize)
                 + (1 << 20))
    vmem_limit = int(min(max(vmem_need * 3 // 2, 16 << 20), 40 << 20))

    out_padded = pl.pallas_call(
        _mlp_kernel,
        out_shape=jax.ShapeDtypeStruct((B_p, Dout_p), out_store_dtype),
        grid_spec=pltpu.PrefetchScalarGridSpec(
            num_scalar_prefetch=0,
            grid=grid,
            in_specs=[
                pl.BlockSpec((tb, Din_p), lambda i: (i, 0)),     # x tile (streamed)
                pl.BlockSpec((Din_p, Dh_p), lambda i: (0, 0)),   # W1 (grid-invariant)
                pl.BlockSpec((1, Dh_p), lambda i: (0, 0)),       # b1
                pl.BlockSpec((Dh_p, Dout_p), lambda i: (0, 0)),  # W2 (grid-invariant)
                pl.BlockSpec((1, Dout_p), lambda i: (0, 0)),     # b2
            ],
            out_specs=pl.BlockSpec((tb, Dout_p), lambda i: (i, 0)),  # lane-dense out
        ),
        compiler_params=pltpu.CompilerParams(
            dimension_semantics=("parallel",),
            vmem_limit_bytes=vmem_limit,
        ),
        cost_estimate=pl.CostEstimate(
            flops=int(flops), transcendentals=0, bytes_accessed=int(bytes_accessed)
        ),
    )(x_p, w1_p, b1_p, w2_p, b2_p)

    # Strip batch + lane padding; cheap [B, Dout] cast back to input dtype.
    return out_padded[:B, :Dout].astype(out_dtype)


# ---------------------------------------------------------------------------
# Pure-JAX references
# ---------------------------------------------------------------------------
def _reference_forward(x, w1, b1, w2, b2, compute_dtype=jnp.float32,
                       store_dtype=None):
    """compute_dtype=bf16 + store_dtype=bf16 simulates the kernel's MXU/store path."""
    xc = x.astype(compute_dtype)
    h = jnp.dot(xc, w1.astype(compute_dtype),
                preferred_element_type=jnp.float32) + b1.astype(jnp.float32)
    h = jnp.where(h > 0, h, jnp.float32(0.01) * h)
    o = jnp.dot(h.astype(compute_dtype), w2.astype(compute_dtype),
                preferred_element_type=jnp.float32) + b2.astype(jnp.float32)
    if store_dtype is not None:
        o = o.astype(store_dtype)
    return o.astype(x.dtype)


if __name__ == "__main__":
    # Module-default feature sizes: input_dim=768, hidden_dim=768//4=192,
    # output_dim=2; small batch for the demo.
    B, Din, Dh, Dout = 64, 768, 192, 2

    key = jax.random.PRNGKey(0)
    kx, kw1, kb1, kw2, kb2 = jax.random.split(key, 5)

    x = jax.random.normal(kx, (B, Din), dtype=jnp.float32)

    # Deterministic synthetic parameters (uniform, roughly PyTorch-Linear-scaled).
    lim1 = 1.0 / (Din ** 0.5)
    lim2 = 1.0 / (Dh ** 0.5)
    w1 = jax.random.uniform(kw1, (Din, Dh), jnp.float32, -lim1, lim1)
    b1 = jax.random.uniform(kb1, (Dh,), jnp.float32, -lim1, lim1)
    w2 = jax.random.uniform(kw2, (Dh, Dout), jnp.float32, -lim2, lim2)
    b2 = jax.random.uniform(kb2, (Dout,), jnp.float32, -lim2, lim2)

    # One-time parameter prep (padding + bf16 cast hoisted out of the forward).
    params = prepare_params(w1, b1, w2, b2)

    out = elephant_rumble_classifier_forward(x, params, tile_b=2048)
    out = jax.block_until_ready(out)
    assert out.shape == (B, Dout)

    # Tight check vs. a reference simulating the same bf16-MXU / bf16-store math.
    ref_bf16 = _reference_forward(x, w1, b1, w2, b2,
                                  compute_dtype=jnp.bfloat16,
                                  store_dtype=jnp.bfloat16)
    assert jnp.allclose(out, ref_bf16, atol=2e-2, rtol=2e-2), "mismatch vs bf16 reference"

    # Looser sanity check vs. the full-f32 PyTorch-equivalent math.
    ref_f32 = _reference_forward(x, w1, b1, w2, b2, compute_dtype=jnp.float32)
    assert jnp.allclose(out, ref_f32, atol=6e-2, rtol=6e-2), "mismatch vs f32 reference"

    print("KERNEL_OK")
</pallas_src>

<mosaic_0001>
module attributes {stable_mosaic.version = 11 : i64} {
  func.func @_mlp_kernel(%arg0: i32, %arg1: memref<32x768xf32, #tpu.memory_space<vmem>>, %arg2: memref<768x256xbf16, #tpu.memory_space<vmem>>, %arg3: memref<1x256xf32, #tpu.memory_space<vmem>>, %arg4: memref<256x128xbf16, #tpu.memory_space<vmem>>, %arg5: memref<1x128xf32, #tpu.memory_space<vmem>>, %arg6: memref<32x128xbf16, #tpu.memory_space<vmem>>) attributes {dimension_semantics = [#tpu.dimension_semantics<parallel>], iteration_bounds = array<i64: 2>, scalar_prefetch = 0 : i64, scratch_operands = 0 : i64, tpu.core_type = #tpu.core_type<tc>, window_params = [{transform_indices = @transform_0, window_bounds = array<i64: 32, 768>}, {pipeline_mode = #tpu.pipeline_mode<synchronous>, transform_indices = @transform_1, window_bounds = array<i64: 768, 256>}, {pipeline_mode = #tpu.pipeline_mode<synchronous>, transform_indices = @transform_2, window_bounds = array<i64: 1, 256>}, {pipeline_mode = #tpu.pipeline_mode<synchronous>, transform_indices = @transform_3, window_bounds = array<i64: 256, 128>}, {pipeline_mode = #tpu.pipeline_mode<synchronous>, transform_indices = @transform_4, window_bounds = array<i64: 1, 128>}, {transform_indices = @transform_5, window_bounds = array<i64: 32, 128>}]} {
    %c0 = arith.constant 0 : index
    %c0_0 = arith.constant 0 : index
    %0 = vector.load %arg1[%c0, %c0_0] : memref<32x768xf32, #tpu.memory_space<vmem>>, vector<32x768xf32>
    %1 = arith.truncf %0 : vector<32x768xf32> to vector<32x768xbf16>
    %c0_1 = arith.constant 0 : index
    %c0_2 = arith.constant 0 : index
    %2 = vector.load %arg2[%c0_1, %c0_2] : memref<768x256xbf16, #tpu.memory_space<vmem>>, vector<768x256xbf16>
    %cst = arith.constant dense<0.000000e+00> : vector<32x256xf32>
    %3 = tpu.matmul %1, %2, %cst {dimension_numbers = #tpu.dot_dimension_numbers<[1], [0], [0], [1], [0, 0, 1, 1], [], []>} : vector<32x768xbf16>, vector<768x256xbf16>, vector<32x256xf32> -> vector<32x256xf32>
    %c0_3 = arith.constant 0 : index
    %c0_4 = arith.constant 0 : index
    %4 = vector.load %arg3[%c0_3, %c0_4] : memref<1x256xf32, #tpu.memory_space<vmem>>, vector<1x256xf32>
    %5 = vector.broadcast %4 : vector<1x256xf32> to vector<32x256xf32>
    %6 = arith.addf %3, %5 : vector<32x256xf32>
    %cst_5 = arith.constant 0.000000e+00 : f32
    %7 = vector.broadcast %cst_5 : f32 to vector<32x256xf32>
    %8 = arith.cmpf ogt, %6, %7 : vector<32x256xf32>
    %cst_6 = arith.constant 0.00999999977 : f32
    %9 = vector.broadcast %cst_6 : f32 to vector<32x256xf32>
    %10 = arith.mulf %9, %6 : vector<32x256xf32>
    %11 = arith.select %8, %6, %10 : vector<32x256xi1>, vector<32x256xf32>
    %12 = arith.truncf %11 : vector<32x256xf32> to vector<32x256xbf16>
    %c0_7 = arith.constant 0 : index
    %c0_8 = arith.constant 0 : index
    %13 = vector.load %arg4[%c0_7, %c0_8] : memref<256x128xbf16, #tpu.memory_space<vmem>>, vector<256x128xbf16>
    %cst_9 = arith.constant dense<0.000000e+00> : vector<32x128xf32>
    %14 = tpu.matmul %12, %13, %cst_9 {dimension_numbers = #tpu.dot_dimension_numbers<[1], [0], [0], [1], [0, 0, 1, 1], [], []>} : vector<32x256xbf16>, vector<256x128xbf16>, vector<32x128xf32> -> vector<32x128xf32>
    %c0_10 = arith.constant 0 : index
    %c0_11 = arith.constant 0 : index
    %15 = vector.load %arg5[%c0_10, %c0_11] : memref<1x128xf32, #tpu.memory_space<vmem>>, vector<1x128xf32>
    %16 = vector.broadcast %15 : vector<1x128xf32> to vector<32x128xf32>
    %17 = arith.addf %14, %16 : vector<32x128xf32>
    %18 = arith.truncf %17 : vector<32x128xf32> to vector<32x128xbf16>
    %c0_12 = arith.constant 0 : index
    %c0_13 = arith.constant 0 : index
    %19 = vector.load %arg6[%c0_12, %c0_13] : memref<32x128xbf16, #tpu.memory_space<vmem>>, vector<32x128xbf16>
    tpu.vector_store %arg6[%c0_12, %c0_13], %18 {strides = array<i32>} : memref<32x128xbf16, #tpu.memory_space<vmem>>, vector<32x128xbf16>,
    return
  }
  func.func @transform_0(%arg0: i32) -> (i32, i32) {
    %c0_i32 = arith.constant 0 : i32
    %c0_i32_0 = arith.constant 0 : i32
    return %arg0, %c0_i32 : i32, i32
  }
  func.func @transform_1(%arg0: i32) -> (i32, i32) {
    %c0_i32 = arith.constant 0 : i32
    %c0_i32_0 = arith.constant 0 : i32
    %c0_i32_1 = arith.constant 0 : i32
    return %c0_i32, %c0_i32_0 : i32, i32
  }
  func.func @transform_2(%arg0: i32) -> (i32, i32) {
    %c0_i32 = arith.constant 0 : i32
    %c0_i32_0 = arith.constant 0 : i32
    %c0_i32_1 = arith.constant 0 : i32
    return %c0_i32, %c0_i32_0 : i32, i32
  }
  func.func @transform_3(%arg0: i32) -> (i32, i32) {
    %c0_i32 = arith.constant 0 : i32
    %c0_i32_0 = arith.constant 0 : i32
    %c0_i32_1 = arith.constant 0 : i32
    return %c0_i32, %c0_i32_0 : i32, i32
  }
  func.func @transform_4(%arg0: i32) -> (i32, i32) {
    %c0_i32 = arith.constant 0 : i32
    %c0_i32_0 = arith.constant 0 : i32
    %c0_i32_1 = arith.constant 0 : i32
    return %c0_i32, %c0_i32_0 : i32, i32
  }
  func.func @transform_5(%arg0: i32) -> (i32, i32) {
    %c0_i32 = arith.constant 0 : i32
    %c0_i32_0 = arith.constant 0 : i32
    return %arg0, %c0_i32 : i32, i32
  }
}

</mosaic_0001>

<llo_original>
// kernel: tpu_custom_call.1
$region0: #{tpu_custom_call.1}
  #allocation0 [shape = 'u32[]', space=smem, size = 0x4, offset = 0x4, fixed_abs, tag = 'smem constant byte address 0x4 - core index']
  #allocation1 [shape = 'u32[144,128]{1,0:T(1,128)}', space=vmem, size = 0x12000, scoped, tag = 'internal scratch']
  %s0 = inlined_call_operand.hbm [shape: f32[64,768], index: 0, kind: input, shape index: {}]
  %s1 = inlined_call_operand.hbm [shape: bf16[768,256], index: 1, kind: input, shape index: {}]
  %s2 = inlined_call_operand.vmem [shape: f32[1,256], index: 2, kind: input, shape index: {}]
  %s3 = inlined_call_operand.hbm [shape: bf16[256,128], index: 3, kind: input, shape index: {}]
  %s4 = inlined_call_operand.vmem [shape: f32[1,128], index: 4, kind: input, shape index: {}]
  %s5 = inlined_call_operand.hbm [shape: bf16[64,128], index: 5, kind: output, shape index: {}]
  %s6 = sld [smem:[#allocation0]]
  $region65: #{tpu_custom_call.1} parent=0
    _
  %s8 = ssub.s32 1, %s6
  %s9 = scalar_select 0, %s8, %s6
  $region1: #{tpu_custom_call.1} parent=0
    #allocation2 [shape = 'u8[196608]{0}', space=vmem, size = 0x30000, scoped, tag = 'input window, operand 0']
    #allocation3 [shape = 's32[2]{0}', space=sflag, size = 0x8, scoped, tag = 'scoped memory for tpu_custom_call.1']
    #allocation4 [shape = 's32[2]{0}', space=sflag, size = 0x8, scoped, tag = 'scoped memory for tpu_custom_call.1']
    #allocation5 [shape = 'u8[393216]{0}', space=vmem, size = 0x60000, scoped, tag = 'input window, operand 1, single buffered']
    #allocation6 [shape = 's32[1]{0}', space=sflag, size = 0x4, scoped, tag = 'scoped memory for tpu_custom_call.1']
    #allocation7 [shape = 'u8[65536]{0}', space=vmem, size = 0x10000, scoped, tag = 'input window, operand 3, single buffered']
    #allocation8 [shape = 'u8[16384]{0}', space=vmem, size = 0x4000, scoped, tag = 'output window, operand 0']
    %10 = vsyncpa [#allocation3], 0
    %s11 = scalar_lea.sflag [#allocation3], 1
    %12 = vsyncpa %s11, 0
    %13 = vsyncpa [#allocation6], 0
    %14 = vsyncpa [#allocation4], 0
    %s15 = scalar_lea.sflag [#allocation4], 1
    %16 = vsyncpa %s15, 0
    loop: start=0, step=1, limit=4
    $region2: #{tpu_custom_call.1} parent=1 // loop_pre_header
      _
    $region3: #{tpu_custom_call.1} parent=1 // loop_header
      %s18 = sphi 0, %s22
      %p19 = scmp.ge.s32.totalorder %s18, 4
      %s28 = sphi 0, %s30
      %s31 = sphi 0, %s28
      %s32 = sphi 0, %s31
      %s48 = sphi 0, %s32
      %s52 = sphi 0, %s52
      %s54 = sphi 0, %s52
      %s55 = sphi 0, %s54
      %s69 = sphi 0, %s55
      %s73 = sphi 0, %s73
      %s75 = sphi 0, %s73
      %s76 = sphi 0, %s75
      %s90 = sphi 0, %s76
      %s94 = sphi 0, %s94
      %s96 = sphi 0, %s94
      %s97 = sphi 0, %s96
      %s111 = sphi 0, %s97
      %s115 = sphi 0, %s115
      %s117 = sphi 0, %s115
      %s118 = sphi 0, %s117
      %s132 = sphi 0, %s118
      %s138 = sphi 0, %s140
      %s141 = sphi 0, %s138
      %s142 = sphi 0, %s141
      %s158 = sphi 0, %s142
    $region4: #{tpu_custom_call.1} parent=1 // loop_header_branch
      %21 = sbr.rel (%p19) target = $region8
    $region5: #{tpu_custom_call.1} parent=1 // loop_body
      %s23 = ssub.s32 %s18, 1
      %s24 = ssub.s32 %s18, 2
      %s25 = sadd.s32 %s18, 1
      %s26 = ssub.s32 %s18, %s25
      %p27 = scmp.eq.s32.totalorder %s26, 0
      %s29 = sadd.s32 %s28, 1
      %s30 = scalar_select %p27, %s28, %s29
      %p33 = pneg %p27
      %p34 = scmp.eq.s32.totalorder %s18, 1
      %p35 = por %p33, %p34
      %p36 = scmp.ne.s32.totalorder %s28, %s31
      %p37 = scmp.eq.s32.totalorder %s18, 0
      %p38 = por %p36, %p37
      %p39 = scmp.ne.s32.totalorder %s28, %s31
      %p40 = scmp.eq.s32.totalorder %s23, 1
      %p41 = por %p39, %p40
      %p42 = scmp.ne.s32.totalorder %s31, %s32
      %p43 = scmp.eq.s32.totalorder %s23, 0
      %p44 = por %p42, %p43
      %p45 = scmp.ne.s32.totalorder %s31, %s32
      %p46 = scmp.eq.s32.totalorder %s24, 1
      %p47 = por %p45, %p46
      %p49 = scmp.ne.s32.totalorder %s32, %s48
      %p50 = scmp.eq.s32.totalorder %s24, 0
      %p51 = por %p49, %p50
      %s53 = sadd.s32 %s52, 1
      %p56 = scmp.eq.s32.totalorder %s18, 1
      %p57 = scmp.ne.s32.totalorder %s52, %s54
      %p58 = scmp.eq.s32.totalorder %s18, 0
      %p59 = por %p57, %p58
      %p60 = scmp.ne.s32.totalorder %s52, %s54
      %p61 = scmp.eq.s32.totalorder %s23, 1
      %p62 = por %p60, %p61
      %p63 = scmp.ne.s32.totalorder %s54, %s55
      %p64 = scmp.eq.s32.totalorder %s23, 0
      %p65 = por %p63, %p64
      %p66 = scmp.ne.s32.totalorder %s54, %s55
      %p67 = scmp.eq.s32.totalorder %s24, 1
      %p68 = por %p66, %p67
      %p70 = scmp.ne.s32.totalorder %s55, %s69
      %p71 = scmp.eq.s32.totalorder %s24, 0
      %p72 = por %p70, %p71
      %s74 = sadd.s32 %s73, 1
      %p77 = scmp.eq.s32.totalorder %s18, 1
      %p78 = scmp.ne.s32.totalorder %s73, %s75
      %p79 = scmp.eq.s32.totalorder %s18, 0
      %p80 = por %p78, %p79
      %p81 = scmp.ne.s32.totalorder %s73, %s75
      %p82 = scmp.eq.s32.totalorder %s23, 1
      %p83 = por %p81, %p82
      %p84 = scmp.ne.s32.totalorder %s75, %s76
      %p85 = scmp.eq.s32.totalorder %s23, 0
      %p86 = por %p84, %p85
      %p87 = scmp.ne.s32.totalorder %s75, %s76
      %p88 = scmp.eq.s32.totalorder %s24, 1
      %p89 = por %p87, %p88
      %p91 = scmp.ne.s32.totalorder %s76, %s90
      %p92 = scmp.eq.s32.totalorder %s24, 0
      %p93 = por %p91, %p92
      %s95 = sadd.s32 %s94, 1
      %p98 = scmp.eq.s32.totalorder %s18, 1
      %p99 = scmp.ne.s32.totalorder %s94, %s96
      %p100 = scmp.eq.s32.totalorder %s18, 0
      %p101 = por %p99, %p100
      %p102 = scmp.ne.s32.totalorder %s94, %s96
      %p103 = scmp.eq.s32.totalorder %s23, 1
      %p104 = por %p102, %p103
      %p105 = scmp.ne.s32.totalorder %s96, %s97
      %p106 = scmp.eq.s32.totalorder %s23, 0
      %p107 = por %p105, %p106
      %p108 = scmp.ne.s32.totalorder %s96, %s97
      %p109 = scmp.eq.s32.totalorder %s24, 1
      %p110 = por %p108, %p109
      %p112 = scmp.ne.s32.totalorder %s97, %s111
      %p113 = scmp.eq.s32.totalorder %s24, 0
      %p114 = por %p112, %p113
      %s116 = sadd.s32 %s115, 1
      %p119 = scmp.eq.s32.totalorder %s18, 1
      %p120 = scmp.ne.s32.totalorder %s115, %s117
      %p121 = scmp.eq.s32.totalorder %s18, 0
      %p122 = por %p120, %p121
      %p123 = scmp.ne.s32.totalorder %s115, %s117
      %p124 = scmp.eq.s32.totalorder %s23, 1
      %p125 = por %p123, %p124
      %p126 = scmp.ne.s32.totalorder %s117, %s118
      %p127 = scmp.eq.s32.totalorder %s23, 0
      %p128 = por %p126, %p127
      %p129 = scmp.ne.s32.totalorder %s117, %s118
      %p130 = scmp.eq.s32.totalorder %s24, 1
      %p131 = por %p129, %p130
      %p133 = scmp.ne.s32.totalorder %s118, %s132
      %p134 = scmp.eq.s32.totalorder %s24, 0
      %p135 = por %p133, %p134
      %s136 = ssub.s32 %s18, %s25
      %p137 = scmp.eq.s32.totalorder %s136, 0
      %s139 = sadd.s32 %s138, 1
      %s140 = scalar_select %p137, %s138, %s139
      %p143 = pneg %p137
      %p144 = scmp.eq.s32.totalorder %s18, 1
      %p145 = por %p143, %p144
      %p146 = scmp.ne.s32.totalorder %s138, %s141
      %p147 = scmp.eq.s32.totalorder %s18, 0
      %p148 = por %p146, %p147
      %p149 = scmp.ne.s32.totalorder %s138, %s141
      %p150 = scmp.eq.s32.totalorder %s23, 1
      %p151 = por %p149, %p150
      %p152 = scmp.ne.s32.totalorder %s141, %s142
      %p153 = scmp.eq.s32.totalorder %s23, 0
      %p154 = por %p152, %p153
      %p155 = scmp.ne.s32.totalorder %s141, %s142
      %p156 = scmp.eq.s32.totalorder %s24, 1
      %p157 = por %p155, %p156
      %p159 = scmp.ne.s32.totalorder %s142, %s158
      %p160 = scmp.eq.s32.totalorder %s24, 0
      %p161 = por %p159, %p160
      %p162 = scmp.le.s32.totalorder 1, %s18
      %p163 = scmp.lt.s32.totalorder %s18, 3
      %p164 = pnand %p162, %p163
      %p165 = pneg %p164
      // Predicated region
      $region9: #{tpu_custom_call.1} parent=5 // pred_check
        _
      $region10: #{tpu_custom_call.1} parent=5 // pred_check_branch
        %167 = sbr.rel (%p164) target = $region12
      $region11: #{tpu_custom_call.1} parent=5 // pred_region
        %s168 = ssub.s32 %s18, 1
        // Predicated region
        $region13: #{tpu_custom_call.1} parent=11 // pred_check
          %p169 = pneg %p65
        $region14: #{tpu_custom_call.1} parent=11 // pred_check_branch
          %171 = sbr.rel (%p169) target = $region16
        $region15: #{tpu_custom_call.1} parent=11 // pred_region
          %s173 = ssub.s32 12288, 12288
          %174 = vsyncadd [#allocation6], %s173
          %s175 = sshll.u32 [#allocation5], 4
          %s176 = int_to_ptr.vmem [resolvable:$true] %s175
          %181 = dma.hbm_to_vmem [thread:$0]  %s1, 12288, %s176, [#allocation6], 128, 128, 8
        $region16: #{tpu_custom_call.1} parent=11 // pred_fallthru
          _
        // Predicated region
        $region17: #{tpu_custom_call.1} parent=11 // pred_check
          %p182 = pneg %p86
        $region18: #{tpu_custom_call.1} parent=11 // pred_check_branch
          %184 = sbr.rel (%p182) target = $region20
        $region19: #{tpu_custom_call.1} parent=11 // pred_region
          _
        $region20: #{tpu_custom_call.1} parent=11 // pred_fallthru
          _
        // Predicated region
        $region21: #{tpu_custom_call.1} parent=11 // pred_check
          %p185 = pneg %p107
        $region22: #{tpu_custom_call.1} parent=11 // pred_check_branch
          %187 = sbr.rel (%p185) target = $region24
        $region23: #{tpu_custom_call.1} parent=11 // pred_region
          %s189 = ssub.s32 2048, 2048
          %190 = vsyncadd [#allocation6], %s189
          %s191 = sshll.u32 [#allocation7], 4
          %s192 = int_to_ptr.vmem [resolvable:$true] %s191
          %197 = dma.hbm_to_vmem [thread:$0]  %s3, 2048, %s192, [#allocation6], 64, 64, 4
        $region24: #{tpu_custom_call.1} parent=11 // pred_fallthru
          _
        // Predicated region
        $region25: #{tpu_custom_call.1} parent=11 // pred_check
          %p198 = pneg %p128
        $region26: #{tpu_custom_call.1} parent=11 // pred_check_branch
          %200 = sbr.rel (%p198) target = $region28
        $region27: #{tpu_custom_call.1} parent=11 // pred_region
          _
        $region28: #{tpu_custom_call.1} parent=11 // pred_fallthru
          _
      $region12: #{tpu_custom_call.1} parent=5 // pred_fallthru
        _
      %p201 = scmp.lt.s32.totalorder %s18, 2
      // Predicated region
      $region29: #{tpu_custom_call.1} parent=5 // pred_check
        %p202 = pneg %p201
      $region30: #{tpu_custom_call.1} parent=5 // pred_check_branch
        %204 = sbr.rel (%p202) target = $region32
      $region31: #{tpu_custom_call.1} parent=5 // pred_region
        // Predicated region
        $region33: #{tpu_custom_call.1} parent=31 // pred_check
          %p205 = pneg %p38
        $region34: #{tpu_custom_call.1} parent=31 // pred_check_branch
          %207 = sbr.rel (%p205) target = $region36
        $region35: #{tpu_custom_call.1} parent=31 // pred_region
          %s208 = sand.u32 %s28, 1
          %s209 = scalar_lea.sflag [#allocation3], %s208
          %s210 = sand.u32 %s28, 1
          %s211 = smul.addr %s210, 192
          %s212 = scalar_lea.vmem [#allocation2], %s211
          %s213 = smul.u32 4, %s18
          %s215 = ssub.s32 3072, 3072
          %216 = vsyncadd %s209, %s215
          %s217 = smul.addr %s213, 6
          %s218 = smul.addr %s217, 128
          %s219 = scalar_lea.hbm %s0, %s218
          %s220 = sshll.u32 %s212, 4
          %s221 = int_to_ptr.vmem [resolvable:$true] %s220
          %226 = dma.hbm_to_vmem [thread:$0]  %s219, 3072, %s221, %s209, 768, 768, 48
        $region36: #{tpu_custom_call.1} parent=31 // pred_fallthru
          _
      $region32: #{tpu_custom_call.1} parent=5 // pred_fallthru
        _
      %p227 = scmp.le.s32.totalorder 1, %s18
      %p228 = scmp.lt.s32.totalorder %s18, 3
      %p229 = pnand %p227, %p228
      %p230 = pneg %p229
      // Predicated region
      $region37: #{tpu_custom_call.1} parent=5 // pred_check
        _
      $region38: #{tpu_custom_call.1} parent=5 // pred_check_branch
        %232 = sbr.rel (%p229) target = $region40
      $region39: #{tpu_custom_call.1} parent=5 // pred_region
        %s233 = ssub.s32 %s18, 1
        %s234 = sand.u32 %s31, 1
        %s235 = scalar_lea.sflag [#allocation3], %s234
        %s236 = sand.u32 %s31, 1
        %s237 = smul.addr %s236, 192
        %s238 = scalar_lea.vmem [#allocation2], %s237
        // Predicated region
        $region41: #{tpu_custom_call.1} parent=39 // pred_check
          %p239 = pneg %p44
        $region42: #{tpu_custom_call.1} parent=39 // pred_check_branch
          %241 = sbr.rel (%p239) target = $region44
        $region43: #{tpu_custom_call.1} parent=39 // pred_region
          %242 = dma.done %s235, 3072
        $region44: #{tpu_custom_call.1} parent=39 // pred_fallthru
          _
        // Predicated region
        $region45: #{tpu_custom_call.1} parent=39 // pred_check
          %p243 = pneg %p65
        $region46: #{tpu_custom_call.1} parent=39 // pred_check_branch
          %245 = sbr.rel (%p243) target = $region48
        $region47: #{tpu_custom_call.1} parent=39 // pred_region
          %246 = dma.done [#allocation6], 12288
        $region48: #{tpu_custom_call.1} parent=39 // pred_fallthru
          _
        // Predicated region
        $region49: #{tpu_custom_call.1} parent=39 // pred_check
          %p247 = pneg %p107
        $region50: #{tpu_custom_call.1} parent=39 // pred_check_branch
          %249 = sbr.rel (%p247) target = $region52
        $region51: #{tpu_custom_call.1} parent=39 // pred_region
          %250 = dma.done [#allocation6], 2048
        $region52: #{tpu_custom_call.1} parent=39 // pred_fallthru
          _
        %s251 = sand.u32 %s31, 1
        %s252 = scalar_lea.sflag [#allocation3], %s251
        %s253 = sand.u32 %s31, 1
        %s254 = smul.addr %s253, 192
        %s255 = scalar_lea.vmem [#allocation2], %s254
        %p256 = pneg %p44
        %p257 = pneg %p41
        %p258 = pneg %p65
        %p259 = pneg %p62
        %p260 = pneg %p86
        %p261 = pneg %p83
        %p262 = pneg %p107
        %p263 = pneg %p104
        %p264 = pneg %p128
        %p265 = pneg %p125
        %p266 = pneg %p154
        %p267 = pneg %p151
        %s268 = sand.u32 %s141, 1
        %s269 = scalar_lea.sflag [#allocation4], %s268
        %s270 = sand.u32 %s141, 1
        %s271 = smul.addr %s270, 16
        %s272 = scalar_lea.vmem [#allocation8], %s271
        %s273 = smul.u32 4, %s23
        %s274 = smul.u32 4, %s23
        %v276 = vld [vmem:[%s238] sm:$0xff]
        %v277 = vld [vmem:[%s238 + $0x8] sm:$0xff]
        %v278 = vld [vmem:[%s238 + $0x10] sm:$0xff]
        %v279 = vld [vmem:[%s238 + $0x18] sm:$0xff]
        %v280 = vld [vmem:[%s238 + $0x20] sm:$0xff]
        %v281 = vld [vmem:[%s238 + $0x28] sm:$0xff]
        %v282 = vld [vmem:[%s238 + $0x30] sm:$0xff]
        %v283 = vld [vmem:[%s238 + $0x38] sm:$0xff]
        %v284 = vld [vmem:[%s238 + $0x40] sm:$0xff]
        %v285 = vld [vmem:[%s238 + $0x48] sm:$0xff]
        %v286 = vld [vmem:[%s238 + $0x50] sm:$0xff]
        %v287 = vld [vmem:[%s238 + $0x58] sm:$0xff]
        %v288 = vld [vmem:[%s238 + $0x60] sm:$0xff]
        %v289 = vld [vmem:[%s238 + $0x68] sm:$0xff]
        %v290 = vld [vmem:[%s238 + $0x70] sm:$0xff]
        %v291 = vld [vmem:[%s238 + $0x78] sm:$0xff]
        %v292 = vld [vmem:[%s238 + $0x80] sm:$0xff]
        %v293 = vld [vmem:[%s238 + $0x88] sm:$0xff]
        %v294 = vld [vmem:[%s238 + $0x90] sm:$0xff]
        %v295 = vld [vmem:[%s238 + $0x98] sm:$0xff]
        %v296 = vld [vmem:[%s238 + $0xa0] sm:$0xff]
        %v297 = vld [vmem:[%s238 + $0xa8] sm:$0xff]
        %v298 = vld [vmem:[%s238 + $0xb0] sm:$0xff]
        %v299 = vld [vmem:[%s238 + $0xb8] sm:$0xff]
        %v300 = vpack.c.bf16 %v282, %v276
        %v301 = vpack.c.bf16 %v283, %v277
        %v302 = vpack.c.bf16 %v284, %v278
        %v303 = vpack.c.bf16 %v285, %v279
        %v304 = vpack.c.bf16 %v286, %v280
        %v305 = vpack.c.bf16 %v287, %v281
        %v306 = vpack.c.bf16 %v294, %v288
        %v307 = vpack.c.bf16 %v295, %v289
        %v308 = vpack.c.bf16 %v296, %v290
        %v309 = vpack.c.bf16 %v297, %v291
        %v310 = vpack.c.bf16 %v298, %v292
        %v311 = vpack.c.bf16 %v299, %v293
        %v312 = vld [vmem:[#allocation5] sm:$0xff]
        %v313 = vld [vmem:[#allocation5 + $0x8] sm:$0xff]
        %v314 = vld [vmem:[#allocation5 + $0x10] sm:$0xff]
        %v315 = vld [vmem:[#allocation5 + $0x18] sm:$0xff]
        %v316 = vld [vmem:[#allocation5 + $0x20] sm:$0xff]
        %v317 = vld [vmem:[#allocation5 + $0x28] sm:$0xff]
        %v318 = vld [vmem:[#allocation5 + $0x30] sm:$0xff]
        %v319 = vld [vmem:[#allocation5 + $0x38] sm:$0xff]
        %v320 = vld [vmem:[#allocation5 + $0x40] sm:$0xff]
        %v321 = vld [vmem:[#allocation5 + $0x48] sm:$0xff]
        %v322 = vld [vmem:[#allocation5 + $0x50] sm:$0xff]
        %v323 = vld [vmem:[#allocation5 + $0x58] sm:$0xff]
        %v324 = vld [vmem:[#allocation5 + $0x60] sm:$0xff]
        %v325 = vld [vmem:[#allocation5 + $0x68] sm:$0xff]
        %v326 = vld [vmem:[#allocation5 + $0x70] sm:$0xff]
        %v327 = vld [vmem:[#allocation5 + $0x78] sm:$0xff]
        %v328 = vld [vmem:[#allocation5 + $0x80] sm:$0xff]
        %v329 = vld [vmem:[#allocation5 + $0x88] sm:$0xff]
        %v330 = vld [vmem:[#allocation5 + $0x90] sm:$0xff]
        %v331 = vld [vmem:[#allocation5 + $0x98] sm:$0xff]
        %v332 = vld [vmem:[#allocation5 + $0xa0] sm:$0xff]
        %v333 = vld [vmem:[#allocation5 + $0xa8] sm:$0xff]
        %v334 = vld [vmem:[#allocation5 + $0xb0] sm:$0xff]
        %v335 = vld [vmem:[#allocation5 + $0xb8] sm:$0xff]
        %v336 = vld [vmem:[#allocation5 + $0xc0] sm:$0xff]
        %v337 = vld [vmem:[#allocation5 + $0xc8] sm:$0xff]
        %v338 = vld [vmem:[#allocation5 + $0xd0] sm:$0xff]
        %v339 = vld [vmem:[#allocation5 + $0xd8] sm:$0xff]
        %v340 = vld [vmem:[#allocation5 + $0xe0] sm:$0xff]
        %v341 = vld [vmem:[#allocation5 + $0xe8] sm:$0xff]
        %v342 = vld [vmem:[#allocation5 + $0xf0] sm:$0xff]
        %v343 = vld [vmem:[#allocation5 + $0xf8] sm:$0xff]
        %v344 = vld [vmem:[#allocation5 + $0x100] sm:$0xff]
        %v345 = vld [vmem:[#allocation5 + $0x108] sm:$0xff]
        %v346 = vld [vmem:[#allocation5 + $0x110] sm:$0xff]
        %v347 = vld [vmem:[#allocation5 + $0x118] sm:$0xff]
        %v348 = vld [vmem:[#allocation5 + $0x120] sm:$0xff]
        %v349 = vld [vmem:[#allocation5 + $0x128] sm:$0xff]
        %v350 = vld [vmem:[#allocation5 + $0x130] sm:$0xff]
        %v351 = vld [vmem:[#allocation5 + $0x138] sm:$0xff]
        %v352 = vld [vmem:[#allocation5 + $0x140] sm:$0xff]
        %v353 = vld [vmem:[#allocation5 + $0x148] sm:$0xff]
        %v354 = vld [vmem:[#allocation5 + $0x150] sm:$0xff]
        %v355 = vld [vmem:[#allocation5 + $0x158] sm:$0xff]
        %v356 = vld [vmem:[#allocation5 + $0x160] sm:$0xff]
        %v357 = vld [vmem:[#allocation5 + $0x168] sm:$0xff]
        %v358 = vld [vmem:[#allocation5 + $0x170] sm:$0xff]
        %v359 = vld [vmem:[#allocation5 + $0x178] sm:$0xff]
        %v360 = vld [vmem:[#allocation5 + $0x180] sm:$0xff]
        %v361 = vld [vmem:[#allocation5 + $0x188] sm:$0xff]
        %v362 = vld [vmem:[#allocation5 + $0x190] sm:$0xff]
        %v363 = vld [vmem:[#allocation5 + $0x198] sm:$0xff]
        %v364 = vld [vmem:[#allocation5 + $0x1a0] sm:$0xff]
        %v365 = vld [vmem:[#allocation5 + $0x1a8] sm:$0xff]
        %v366 = vld [vmem:[#allocation5 + $0x1b0] sm:$0xff]
        %v367 = vld [vmem:[#allocation5 + $0x1b8] sm:$0xff]
        %v368 = vld [vmem:[#allocation5 + $0x1c0] sm:$0xff]
        %v369 = vld [vmem:[#allocation5 + $0x1c8] sm:$0xff]
        %v370 = vld [vmem:[#allocation5 + $0x1d0] sm:$0xff]
        %v371 = vld [vmem:[#allocation5 + $0x1d8] sm:$0xff]
        %v372 = vld [vmem:[#allocation5 + $0x1e0] sm:$0xff]
        %v373 = vld [vmem:[#allocation5 + $0x1e8] sm:$0xff]
        %v374 = vld [vmem:[#allocation5 + $0x1f0] sm:$0xff]
        %v375 = vld [vmem:[#allocation5 + $0x1f8] sm:$0xff]
        %v376 = vld [vmem:[#allocation5 + $0x200] sm:$0xff]
        %v377 = vld [vmem:[#allocation5 + $0x208] sm:$0xff]
        %v378 = vld [vmem:[#allocation5 + $0x210] sm:$0xff]
        %v379 = vld [vmem:[#allocation5 + $0x218] sm:$0xff]
        %v380 = vld [vmem:[#allocation5 + $0x220] sm:$0xff]
        %v381 = vld [vmem:[#allocation5 + $0x228] sm:$0xff]
        %v382 = vld [vmem:[#allocation5 + $0x230] sm:$0xff]
        %v383 = vld [vmem:[#allocation5 + $0x238] sm:$0xff]
        %v384 = vld [vmem:[#allocation5 + $0x240] sm:$0xff]
        %v385 = vld [vmem:[#allocation5 + $0x248] sm:$0xff]
        %v386 = vld [vmem:[#allocation5 + $0x250] sm:$0xff]
        %v387 = vld [vmem:[#allocation5 + $0x258] sm:$0xff]
        %v388 = vld [vmem:[#allocation5 + $0x260] sm:$0xff]
        %v389 = vld [vmem:[#allocation5 + $0x268] sm:$0xff]
        %v390 = vld [vmem:[#allocation5 + $0x270] sm:$0xff]
        %v391 = vld [vmem:[#allocation5 + $0x278] sm:$0xff]
        %v392 = vld [vmem:[#allocation5 + $0x280] sm:$0xff]
        %v393 = vld [vmem:[#allocation5 + $0x288] sm:$0xff]
        %v394 = vld [vmem:[#allocation5 + $0x290] sm:$0xff]
        %v395 = vld [vmem:[#allocation5 + $0x298] sm:$0xff]
        %v396 = vld [vmem:[#allocation5 + $0x2a0] sm:$0xff]
        %v397 = vld [vmem:[#allocation5 + $0x2a8] sm:$0xff]
        %v398 = vld [vmem:[#allocation5 + $0x2b0] sm:$0xff]
        %v399 = vld [vmem:[#allocation5 + $0x2b8] sm:$0xff]
        %v400 = vld [vmem:[#allocation5 + $0x2c0] sm:$0xff]
        %v401 = vld [vmem:[#allocation5 + $0x2c8] sm:$0xff]
        %v402 = vld [vmem:[#allocation5 + $0x2d0] sm:$0xff]
        %v403 = vld [vmem:[#allocation5 + $0x2d8] sm:$0xff]
        %v404 = vld [vmem:[#allocation5 + $0x2e0] sm:$0xff]
        %v405 = vld [vmem:[#allocation5 + $0x2e8] sm:$0xff]
        %v406 = vld [vmem:[#allocation5 + $0x2f0] sm:$0xff]
        %v407 = vld [vmem:[#allocation5 + $0x2f8] sm:$0xff]
        %v408 = vld [vmem:[%s2] sm:$0x3]
        %v410 = vlaneseq
        %v411 = vshrl.u32 %v410, 7
        %v412 = vsub.s32 0, %v411
        %v413 = vrot.slane %v408, %v412
        %v414 = vlaneseq
        %v415 = vshrl.u32 %v414, 7
        %v416 = vsub.s32 1, %v415
        %v417 = vrot.slane %v408, %v416
        %v516 = vunpack.c.l.b16 %v312
        %v517 = vunpack.c.h.b16 %v312
        %v518 = vunpack.c.l.b16 %v313
        %v519 = vunpack.c.h.b16 %v313
        %v520 = vunpack.c.l.b16 %v314
        %v521 = vunpack.c.h.b16 %v314
        %v522 = vunpack.c.l.b16 %v315
        %v523 = vunpack.c.h.b16 %v315
        %v524 = vunpack.c.l.b16 %v316
        %v525 = vunpack.c.h.b16 %v316
        %v526 = vunpack.c.l.b16 %v317
        %v527 = vunpack.c.h.b16 %v317
        %v528 = vunpack.c.l.b16 %v318
        %v529 = vunpack.c.h.b16 %v318
        %v530 = vunpack.c.l.b16 %v319
        %v531 = vunpack.c.h.b16 %v319
        %v532 = vunpack.c.l.b16 %v320
        %v533 = vunpack.c.h.b16 %v320
        %v534 = vunpack.c.l.b16 %v321
        %v535 = vunpack.c.h.b16 %v321
        %v536 = vunpack.c.l.b16 %v322
        %v537 = vunpack.c.h.b16 %v322
        %v538 = vunpack.c.l.b16 %v323
        %v539 = vunpack.c.h.b16 %v323
        %v540 = vunpack.c.l.b16 %v324
        %v541 = vunpack.c.h.b16 %v324
        %v542 = vunpack.c.l.b16 %v325
        %v543 = vunpack.c.h.b16 %v325
        %v544 = vunpack.c.l.b16 %v326
        %v545 = vunpack.c.h.b16 %v326
        %v546 = vunpack.c.l.b16 %v327
        %v547 = vunpack.c.h.b16 %v327
        %v548 = vunpack.c.l.b16 %v328
        %v549 = vunpack.c.h.b16 %v328
        %v550 = vunpack.c.l.b16 %v329
        %v551 = vunpack.c.h.b16 %v329
        %v552 = vunpack.c.l.b16 %v330
        %v553 = vunpack.c.h.b16 %v330
        %v554 = vunpack.c.l.b16 %v331
        %v555 = vunpack.c.h.b16 %v331
        %v556 = vunpack.c.l.b16 %v332
        %v557 = vunpack.c.h.b16 %v332
        %v558 = vunpack.c.l.b16 %v333
        %v559 = vunpack.c.h.b16 %v333
        %v560 = vunpack.c.l.b16 %v334
        %v561 = vunpack.c.h.b16 %v334
        %v562 = vunpack.c.l.b16 %v335
        %v563 = vunpack.c.h.b16 %v335
        %v564 = vunpack.c.l.b16 %v336
        %v565 = vunpack.c.h.b16 %v336
        %v566 = vunpack.c.l.b16 %v337
        %v567 = vunpack.c.h.b16 %v337
        %v568 = vunpack.c.l.b16 %v338
        %v569 = vunpack.c.h.b16 %v338
        %v570 = vunpack.c.l.b16 %v339
        %v571 = vunpack.c.h.b16 %v339
        %v572 = vunpack.c.l.b16 %v340
        %v573 = vunpack.c.h.b16 %v340
        %v574 = vunpack.c.l.b16 %v341
        %v575 = vunpack.c.h.b16 %v341
        %v576 = vunpack.c.l.b16 %v342
        %v577 = vunpack.c.h.b16 %v342
        %v578 = vunpack.c.l.b16 %v343
        %v579 = vunpack.c.h.b16 %v343
        %v580 = vunpack.c.l.b16 %v344
        %v581 = vunpack.c.h.b16 %v344
        %v582 = vunpack.c.l.b16 %v345
        %v583 = vunpack.c.h.b16 %v345
        %v584 = vunpack.c.l.b16 %v346
        %v585 = vunpack.c.h.b16 %v346
        %v586 = vunpack.c.l.b16 %v347
        %v587 = vunpack.c.h.b16 %v347
        %v588 = vunpack.c.l.b16 %v348
        %v589 = vunpack.c.h.b16 %v348
        %v590 = vunpack.c.l.b16 %v349
        %v591 = vunpack.c.h.b16 %v349
        %v592 = vunpack.c.l.b16 %v350
        %v593 = vunpack.c.h.b16 %v350
        %v594 = vunpack.c.l.b16 %v351
        %v595 = vunpack.c.h.b16 %v351
        %v596 = vunpack.c.l.b16 %v352
        %v597 = vunpack.c.h.b16 %v352
        %v598 = vunpack.c.l.b16 %v353
        %v599 = vunpack.c.h.b16 %v353
        %v600 = vunpack.c.l.b16 %v354
        %v601 = vunpack.c.h.b16 %v354
        %v602 = vunpack.c.l.b16 %v355
        %v603 = vunpack.c.h.b16 %v355
        %v604 = vunpack.c.l.b16 %v356
        %v605 = vunpack.c.h.b16 %v356
        %v606 = vunpack.c.l.b16 %v357
        %v607 = vunpack.c.h.b16 %v357
        %v608 = vunpack.c.l.b16 %v358
        %v609 = vunpack.c.h.b16 %v358
        %v610 = vunpack.c.l.b16 %v359
        %v611 = vunpack.c.h.b16 %v359
        %v612 = vunpack.c.l.b16 %v360
        %v613 = vunpack.c.h.b16 %v360
        %v614 = vunpack.c.l.b16 %v361
        %v615 = vunpack.c.h.b16 %v361
        %v616 = vunpack.c.l.b16 %v362
        %v617 = vunpack.c.h.b16 %v362
        %v618 = vunpack.c.l.b16 %v363
        %v619 = vunpack.c.h.b16 %v363
        %v620 = vunpack.c.l.b16 %v364
        %v621 = vunpack.c.h.b16 %v364
        %v622 = vunpack.c.l.b16 %v365
        %v623 = vunpack.c.h.b16 %v365
        %v624 = vunpack.c.l.b16 %v366
        %v625 = vunpack.c.h.b16 %v366
        %v626 = vunpack.c.l.b16 %v367
        %v627 = vunpack.c.h.b16 %v367
        %v628 = vunpack.c.l.b16 %v368
        %v629 = vunpack.c.h.b16 %v368
        %v630 = vunpack.c.l.b16 %v369
        %v631 = vunpack.c.h.b16 %v369
        %v632 = vunpack.c.l.b16 %v370
        %v633 = vunpack.c.h.b16 %v370
        %v634 = vunpack.c.l.b16 %v371
        %v635 = vunpack.c.h.b16 %v371
        %v636 = vunpack.c.l.b16 %v372
        %v637 = vunpack.c.h.b16 %v372
        %v638 = vunpack.c.l.b16 %v373
        %v639 = vunpack.c.h.b16 %v373
        %v640 = vunpack.c.l.b16 %v374
        %v641 = vunpack.c.h.b16 %v374
        %v642 = vunpack.c.l.b16 %v375
        %v643 = vunpack.c.h.b16 %v375
        %v644 = vunpack.c.l.b16 %v376
        %v645 = vunpack.c.h.b16 %v376
        %v646 = vunpack.c.l.b16 %v377
        %v647 = vunpack.c.h.b16 %v377
        %v648 = vunpack.c.l.b16 %v378
        %v649 = vunpack.c.h.b16 %v378
        %v650 = vunpack.c.l.b16 %v379
        %v651 = vunpack.c.h.b16 %v379
        %v652 = vunpack.c.l.b16 %v380
        %v653 = vunpack.c.h.b16 %v380
        %v654 = vunpack.c.l.b16 %v381
        %v655 = vunpack.c.h.b16 %v381
        %v656 = vunpack.c.l.b16 %v382
        %v657 = vunpack.c.h.b16 %v382
        %v658 = vunpack.c.l.b16 %v383
        %v659 = vunpack.c.h.b16 %v383
        %v660 = vunpack.c.l.b16 %v384
        %v661 = vunpack.c.h.b16 %v384
        %v662 = vunpack.c.l.b16 %v385
        %v663 = vunpack.c.h.b16 %v385
        %v664 = vunpack.c.l.b16 %v386
        %v665 = vunpack.c.h.b16 %v386
        %v666 = vunpack.c.l.b16 %v387
        %v667 = vunpack.c.h.b16 %v387
        %v668 = vunpack.c.l.b16 %v388
        %v669 = vunpack.c.h.b16 %v388
        %v670 = vunpack.c.l.b16 %v389
        %v671 = vunpack.c.h.b16 %v389
        %v672 = vunpack.c.l.b16 %v390
        %v673 = vunpack.c.h.b16 %v390
        %v674 = vunpack.c.l.b16 %v391
        %v675 = vunpack.c.h.b16 %v391
        %v676 = vunpack.c.l.b16 %v392
        %v677 = vunpack.c.h.b16 %v392
        %v678 = vunpack.c.l.b16 %v393
        %v679 = vunpack.c.h.b16 %v393
        %v680 = vunpack.c.l.b16 %v394
        %v681 = vunpack.c.h.b16 %v394
        %v682 = vunpack.c.l.b16 %v395
        %v683 = vunpack.c.h.b16 %v395
        %v684 = vunpack.c.l.b16 %v396
        %v685 = vunpack.c.h.b16 %v396
        %v686 = vunpack.c.l.b16 %v397
        %v687 = vunpack.c.h.b16 %v397
        %v688 = vunpack.c.l.b16 %v398
        %v689 = vunpack.c.h.b16 %v398
        %v690 = vunpack.c.l.b16 %v399
        %v691 = vunpack.c.h.b16 %v399
        %v692 = vunpack.c.l.b16 %v400
        %v693 = vunpack.c.h.b16 %v400
        %v694 = vunpack.c.l.b16 %v401
        %v695 = vunpack.c.h.b16 %v401
        %v696 = vunpack.c.l.b16 %v402
        %v697 = vunpack.c.h.b16 %v402
        %v698 = vunpack.c.l.b16 %v403
        %v699 = vunpack.c.h.b16 %v403
        %v700 = vunpack.c.l.b16 %v404
        %v701 = vunpack.c.h.b16 %v404
        %v702 = vunpack.c.l.b16 %v405
        %v703 = vunpack.c.h.b16 %v405
        %v704 = vunpack.c.l.b16 %v406
        %v705 = vunpack.c.h.b16 %v406
        %v706 = vunpack.c.l.b16 %v407
        %v707 = vunpack.c.h.b16 %v407
        %v708 = vpack.c.b16 %v518, %v516
        %v709 = vpack.c.b16 %v519, %v517
        %v710 = vpack.c.b16 %v522, %v520
        %v711 = vpack.c.b16 %v523, %v521
        %v712 = vpack.c.b16 %v526, %v524
        %v713 = vpack.c.b16 %v527, %v525
        %v714 = vpack.c.b16 %v530, %v528
        %v715 = vpack.c.b16 %v531, %v529
        %v716 = vpack.c.b16 %v534, %v532
        %v717 = vpack.c.b16 %v535, %v533
        %v718 = vpack.c.b16 %v538, %v536
        %v719 = vpack.c.b16 %v539, %v537
        %v720 = vpack.c.b16 %v542, %v540
        %v721 = vpack.c.b16 %v543, %v541
        %v722 = vpack.c.b16 %v546, %v544
        %v723 = vpack.c.b16 %v547, %v545
        %v724 = vpack.c.b16 %v550, %v548
        %v725 = vpack.c.b16 %v551, %v549
        %v726 = vpack.c.b16 %v554, %v552
        %v727 = vpack.c.b16 %v555, %v553
        %v728 = vpack.c.b16 %v558, %v556
        %v729 = vpack.c.b16 %v559, %v557
        %v730 = vpack.c.b16 %v562, %v560
        %v731 = vpack.c.b16 %v563, %v561
        %v732 = vpack.c.b16 %v566, %v564
        %v733 = vpack.c.b16 %v567, %v565
        %v734 = vpack.c.b16 %v570, %v568
        %v735 = vpack.c.b16 %v571, %v569
        %v736 = vpack.c.b16 %v574, %v572
        %v737 = vpack.c.b16 %v575, %v573
        %v738 = vpack.c.b16 %v578, %v576
        %v739 = vpack.c.b16 %v579, %v577
        %v740 = vpack.c.b16 %v582, %v580
        %v741 = vpack.c.b16 %v583, %v581
        %v742 = vpack.c.b16 %v586, %v584
        %v743 = vpack.c.b16 %v587, %v585
        %v744 = vpack.c.b16 %v590, %v588
        %v745 = vpack.c.b16 %v591, %v589
        %v746 = vpack.c.b16 %v594, %v592
        %v747 = vpack.c.b16 %v595, %v593
        %v748 = vpack.c.b16 %v598, %v596
        %v749 = vpack.c.b16 %v599, %v597
        %v750 = vpack.c.b16 %v602, %v600
        %v751 = vpack.c.b16 %v603, %v601
        %v752 = vpack.c.b16 %v606, %v604
        %v753 = vpack.c.b16 %v607, %v605
        %v754 = vpack.c.b16 %v610, %v608
        %v755 = vpack.c.b16 %v611, %v609
        %v756 = vpack.c.b16 %v614, %v612
        %v757 = vpack.c.b16 %v615, %v613
        %v758 = vpack.c.b16 %v618, %v616
        %v759 = vpack.c.b16 %v619, %v617
        %v760 = vpack.c.b16 %v622, %v620
        %v761 = vpack.c.b16 %v623, %v621
        %v762 = vpack.c.b16 %v626, %v624
        %v763 = vpack.c.b16 %v627, %v625
        %v764 = vpack.c.b16 %v630, %v628
        %v765 = vpack.c.b16 %v631, %v629
        %v766 = vpack.c.b16 %v634, %v632
        %v767 = vpack.c.b16 %v635, %v633
        %v768 = vpack.c.b16 %v638, %v636
        %v769 = vpack.c.b16 %v639, %v637
        %v770 = vpack.c.b16 %v642, %v640
        %v771 = vpack.c.b16 %v643, %v641
        %v772 = vpack.c.b16 %v646, %v644
        %v773 = vpack.c.b16 %v647, %v645
        %v774 = vpack.c.b16 %v650, %v648
        %v775 = vpack.c.b16 %v651, %v649
        %v776 = vpack.c.b16 %v654, %v652
        %v777 = vpack.c.b16 %v655, %v653
        %v778 = vpack.c.b16 %v658, %v656
        %v779 = vpack.c.b16 %v659, %v657
        %v780 = vpack.c.b16 %v662, %v660
        %v781 = vpack.c.b16 %v663, %v661
        %v782 = vpack.c.b16 %v666, %v664
        %v783 = vpack.c.b16 %v667, %v665
        %v784 = vpack.c.b16 %v670, %v668
        %v785 = vpack.c.b16 %v671, %v669
        %v786 = vpack.c.b16 %v674, %v672
        %v787 = vpack.c.b16 %v675, %v673
        %v788 = vpack.c.b16 %v678, %v676
        %v789 = vpack.c.b16 %v679, %v677
        %v790 = vpack.c.b16 %v682, %v680
        %v791 = vpack.c.b16 %v683, %v681
        %v792 = vpack.c.b16 %v686, %v684
        %v793 = vpack.c.b16 %v687, %v685
        %v794 = vpack.c.b16 %v690, %v688
        %v795 = vpack.c.b16 %v691, %v689
        %v796 = vpack.c.b16 %v694, %v692
        %v797 = vpack.c.b16 %v695, %v693
        %v798 = vpack.c.b16 %v698, %v696
        %v799 = vpack.c.b16 %v699, %v697
        %v800 = vpack.c.b16 %v702, %v700
        %v801 = vpack.c.b16 %v703, %v701
        %v802 = vpack.c.b16 %v706, %v704
        %v803 = vpack.c.b16 %v707, %v705
        %900 = vmatprep.subr.bf16.mxu0 %v723
        %901 = vmatpush1.bf16.msra.mxu0 %v722
        %902 = vmatprep.subr.bf16.mxu0 %v721
        %903 = vmatpush1.bf16.msra.mxu0 %v720
        %904 = vmatprep.subr.bf16.mxu0 %v719
        %905 = vmatpush1.bf16.msra.mxu0 %v718
        %906 = vmatprep.subr.bf16.mxu0 %v717
        %907 = vmatpush1.bf16.msra.mxu0 %v716
        %908 = vmatprep.subr.bf16.mxu0 %v715
        %909 = vmatpush1.bf16.msra.mxu0 %v714
        %910 = vmatprep.subr.bf16.mxu0 %v713
        %911 = vmatpush1.bf16.msra.mxu0 %v712
        %912 = vmatprep.subr.bf16.mxu0 %v711
        %913 = vmatpush1.bf16.msra.mxu0 %v710
        %914 = vmatprep.subr.bf16.mxu0 %v709
        %915 = vmatpush1.bf16.msra.mxu0 %v708
        %916 = vmatprep.subr.bf16.mxu0 %v739
        %917 = vmatpush2.bf16.msra.mxu0 %v738
        %918 = vmatprep.subr.bf16.mxu0 %v737
        %919 = vmatpush2.bf16.msra.mxu0 %v736
        %920 = vmatprep.subr.bf16.mxu0 %v735
        %921 = vmatpush2.bf16.msra.mxu0 %v734
        %922 = vmatprep.subr.bf16.mxu0 %v733
        %923 = vmatpush2.bf16.msra.mxu0 %v732
        %924 = vmatprep.subr.bf16.mxu0 %v731
        %925 = vmatpush2.bf16.msra.mxu0 %v730
        %926 = vmatprep.subr.bf16.mxu0 %v729
        %927 = vmatpush2.bf16.msra.mxu0 %v728
        %928 = vmatprep.subr.bf16.mxu0 %v727
        %929 = vmatpush2.bf16.msra.mxu0 %v726
        %930 = vmatprep.subr.bf16.mxu0 %v725
        %931 = vmatpush2.bf16.msra.mxu0 %v724
        %932 = vmatprep.mubr.bf16.mxu0 %v301
        %933 = vmatmul.mubr.bf16.gmra.mxu0 %v300
        %v934 = vpop.f32.mrf.mxu0
        %v935 = vadd.f32 %v413, %v934
        %v936 = vpop.f32.mrf.mxu0
        %v937 = vadd.f32 %v417, %v936
        %v938 = vpop.f32.mrf.mxu0
        %v939 = vadd.f32 %v413, %v938
        %v940 = vpop.f32.mrf.mxu0
        %v941 = vadd.f32 %v417, %v940
        %942 = vmatprep.mubr.bf16.mxu0 %v307
        %943 = vmatmul.mubr.bf16.gmra.mxu0 %v306
        %v944 = vpop.f32.mrf.mxu0
        %v945 = vadd.f32 %v413, %v944
        %v946 = vpop.f32.mrf.mxu0
        %v947 = vadd.f32 %v417, %v946
        %v948 = vpop.f32.mrf.mxu0
        %v949 = vadd.f32 %v413, %v948
        %v950 = vpop.f32.mrf.mxu0
        %v951 = vadd.f32 %v417, %v950
        %952 = vdwg.mxu0
        %953 = vmatprep.subr.bf16.mxu0 %v755
        %954 = vmatpush1.bf16.msra.mxu0 %v754
        %955 = vmatprep.subr.bf16.mxu0 %v753
        %956 = vmatpush1.bf16.msra.mxu0 %v752
        %957 = vmatprep.subr.bf16.mxu0 %v751
        %958 = vmatpush1.bf16.msra.mxu0 %v750
        %959 = vmatprep.subr.bf16.mxu0 %v749
        %960 = vmatpush1.bf16.msra.mxu0 %v748
        %961 = vmatprep.subr.bf16.mxu0 %v747
        %962 = vmatpush1.bf16.msra.mxu0 %v746
        %963 = vmatprep.subr.bf16.mxu0 %v745
        %964 = vmatpush1.bf16.msra.mxu0 %v744
        %965 = vmatprep.subr.bf16.mxu0 %v743
        %966 = vmatpush1.bf16.msra.mxu0 %v742
        %967 = vmatprep.subr.bf16.mxu0 %v741
        %968 = vmatpush1.bf16.msra.mxu0 %v740
        %969 = vmatprep.subr.bf16.mxu0 %v771
        %970 = vmatpush2.bf16.msra.mxu0 %v770
        %971 = vmatprep.subr.bf16.mxu0 %v769
        %972 = vmatpush2.bf16.msra.mxu0 %v768
        %973 = vmatprep.subr.bf16.mxu0 %v767
        %974 = vmatpush2.bf16.msra.mxu0 %v766
        %975 = vmatprep.subr.bf16.mxu0 %v765
        %976 = vmatpush2.bf16.msra.mxu0 %v764
        %977 = vmatprep.subr.bf16.mxu0 %v763
        %978 = vmatpush2.bf16.msra.mxu0 %v762
        %979 = vmatprep.subr.bf16.mxu0 %v761
        %980 = vmatpush2.bf16.msra.mxu0 %v760
        %981 = vmatprep.subr.bf16.mxu0 %v759
        %982 = vmatpush2.bf16.msra.mxu0 %v758
        %983 = vmatprep.subr.bf16.mxu0 %v757
        %984 = vmatpush2.bf16.msra.mxu0 %v756
        %985 = vmatprep.mubr.bf16.mxu0 %v303
        %986 = vmatmul.mubr.bf16.gmra.mxu0 %v302
        %v987 = vpop.f32.mrf.mxu0
        %v988 = vadd.f32 %v935, %v987
        %v989 = vpop.f32.mrf.mxu0
        %v990 = vadd.f32 %v937, %v989
        %v991 = vpop.f32.mrf.mxu0
        %v992 = vadd.f32 %v939, %v991
        %v993 = vpop.f32.mrf.mxu0
        %v994 = vadd.f32 %v941, %v993
        %995 = vmatprep.mubr.bf16.mxu0 %v309
        %996 = vmatmul.mubr.bf16.gmra.mxu0 %v308
        %v997 = vpop.f32.mrf.mxu0
        %v998 = vadd.f32 %v945, %v997
        %v999 = vpop.f32.mrf.mxu0
        %v1000 = vadd.f32 %v947, %v999
        %v1001 = vpop.f32.mrf.mxu0
        %v1002 = vadd.f32 %v949, %v1001
        %v1003 = vpop.f32.mrf.mxu0
        %v1004 = vadd.f32 %v951, %v1003
        %1005 = vdwg.mxu0
        %1006 = vmatprep.subr.bf16.mxu0 %v787
        %1007 = vmatpush1.bf16.msra.mxu0 %v786
        %1008 = vmatprep.subr.bf16.mxu0 %v785
        %1009 = vmatpush1.bf16.msra.mxu0 %v784
        %1010 = vmatprep.subr.bf16.mxu0 %v783
        %1011 = vmatpush1.bf16.msra.mxu0 %v782
        %1012 = vmatprep.subr.bf16.mxu0 %v781
        %1013 = vmatpush1.bf16.msra.mxu0 %v780
        %1014 = vmatprep.subr.bf16.mxu0 %v779
        %1015 = vmatpush1.bf16.msra.mxu0 %v778
        %1016 = vmatprep.subr.bf16.mxu0 %v777
        %1017 = vmatpush1.bf16.msra.mxu0 %v776
        %1018 = vmatprep.subr.bf16.mxu0 %v775
        %1019 = vmatpush1.bf16.msra.mxu0 %v774
        %1020 = vmatprep.subr.bf16.mxu0 %v773
        %1021 = vmatpush1.bf16.msra.mxu0 %v772
        %1022 = vmatprep.subr.bf16.mxu0 %v803
        %1023 = vmatpush2.bf16.msra.mxu0 %v802
        %1024 = vmatprep.subr.bf16.mxu0 %v801
        %1025 = vmatpush2.bf16.msra.mxu0 %v800
        %1026 = vmatprep.subr.bf16.mxu0 %v799
        %1027 = vmatpush2.bf16.msra.mxu0 %v798
        %1028 = vmatprep.subr.bf16.mxu0 %v797
        %1029 = vmatpush2.bf16.msra.mxu0 %v796
        %1030 = vmatprep.subr.bf16.mxu0 %v795
        %1031 = vmatpush2.bf16.msra.mxu0 %v794
        %1032 = vmatprep.subr.bf16.mxu0 %v793
        %1033 = vmatpush2.bf16.msra.mxu0 %v792
        %1034 = vmatprep.subr.bf16.mxu0 %v791
        %1035 = vmatpush2.bf16.msra.mxu0 %v790
        %1036 = vmatprep.subr.bf16.mxu0 %v789
        %1037 = vmatpush2.bf16.msra.mxu0 %v788
        %1038 = vmatprep.mubr.bf16.mxu0 %v305
        %1039 = vmatmul.mubr.bf16.gmra.mxu0 %v304
        %v1040 = vpop.f32.mrf.mxu0
        %v1041 = vadd.f32 %v988, %v1040
        %v1042 = vpop.f32.mrf.mxu0
        %v1043 = vadd.f32 %v990, %v1042
        %v1044 = vpop.f32.mrf.mxu0
        %v1045 = vadd.f32 %v992, %v1044
        %v1046 = vpop.f32.mrf.mxu0
        %v1047 = vadd.f32 %v994, %v1046
        %1048 = vmatprep.mubr.bf16.mxu0 %v311
        %1049 = vmatmul.mubr.bf16.gmra.mxu0 %v310
        %v1050 = vpop.f32.mrf.mxu0
        %v1051 = vadd.f32 %v998, %v1050
        %v1052 = vpop.f32.mrf.mxu0
        %v1053 = vadd.f32 %v1000, %v1052
        %v1054 = vpop.f32.mrf.mxu0
        %v1055 = vadd.f32 %v1002, %v1054
        %v1056 = vpop.f32.mrf.mxu0
        %v1057 = vadd.f32 %v1004, %v1056
        %1058 = vdwg.mxu0
        %vm1059 = vcmp.gt.f32.partialorder %v1041, 0.0
        %vm1060 = vcmp.gt.f32.partialorder %v1043, 0.0
        %vm1061 = vcmp.gt.f32.partialorder %v1045, 0.0
        %vm1062 = vcmp.gt.f32.partialorder %v1047, 0.0
        %vm1063 = vcmp.gt.f32.partialorder %v1051, 0.0
        %vm1064 = vcmp.gt.f32.partialorder %v1053, 0.0
        %vm1065 = vcmp.gt.f32.partialorder %v1055, 0.0
        %vm1066 = vcmp.gt.f32.partialorder %v1057, 0.0
        %v1067 = vmul.f32 %v1041, 0.01
        %v1068 = vmul.f32 %v1043, 0.01
        %v1069 = vmul.f32 %v1045, 0.01
        %v1070 = vmul.f32 %v1047, 0.01
        %v1071 = vmul.f32 %v1051, 0.01
        %v1072 = vmul.f32 %v1053, 0.01
        %v1073 = vmul.f32 %v1055, 0.01
        %v1074 = vmul.f32 %v1057, 0.01
        %v1075 = vsel %vm1059, %v1041, %v1067
        %v1076 = vsel %vm1060, %v1043, %v1068
        %v1077 = vsel %vm1061, %v1045, %v1069
        %v1078 = vsel %vm1062, %v1047, %v1070
        %v1079 = vsel %vm1063, %v1051, %v1071
        %v1080 = vsel %vm1064, %v1053, %v1072
        %v1081 = vsel %vm1065, %v1055, %v1073
        %v1082 = vsel %vm1066, %v1057, %v1074
        %v1083 = vpack.c.bf16 %v1077, %v1075
        %v1084 = vpack.c.bf16 %v1078, %v1076
        %v1085 = vpack.c.bf16 %v1081, %v1079
        %v1086 = vpack.c.bf16 %v1082, %v1080
        %v1087 = vld [vmem:[#allocation7] sm:$0xf]
        %v1088 = vld [vmem:[#allocation7 + $0x4] sm:$0xf]
        %v1089 = vld [vmem:[#allocation7 + $0x8] sm:$0xf]
        %v1090 = vld [vmem:[#allocation7 + $0xc] sm:$0xf]
        %v1091 = vld [vmem:[#allocation7 + $0x10] sm:$0xf]
        %v1092 = vld [vmem:[#allocation7 + $0x14] sm:$0xf]
        %v1093 = vld [vmem:[#allocation7 + $0x18] sm:$0xf]
        %v1094 = vld [vmem:[#allocation7 + $0x1c] sm:$0xf]
        %v1095 = vld [vmem:[#allocation7 + $0x20] sm:$0xf]
        %v1096 = vld [vmem:[#allocation7 + $0x24] sm:$0xf]
        %v1097 = vld [vmem:[#allocation7 + $0x28] sm:$0xf]
        %v1098 = vld [vmem:[#allocation7 + $0x2c] sm:$0xf]
        %v1099 = vld [vmem:[#allocation7 + $0x30] sm:$0xf]
        %v1100 = vld [vmem:[#allocation7 + $0x34] sm:$0xf]
        %v1101 = vld [vmem:[#allocation7 + $0x38] sm:$0xf]
        %v1102 = vld [vmem:[#allocation7 + $0x3c] sm:$0xf]
        %v1103 = vld [vmem:[#allocation7 + $0x40] sm:$0xf]
        %v1104 = vld [vmem:[#allocation7 + $0x44] sm:$0xf]
        %v1105 = vld [vmem:[#allocation7 + $0x48] sm:$0xf]
        %v1106 = vld [vmem:[#allocation7 + $0x4c] sm:$0xf]
        %v1107 = vld [vmem:[#allocation7 + $0x50] sm:$0xf]
        %v1108 = vld [vmem:[#allocation7 + $0x54] sm:$0xf]
        %v1109 = vld [vmem:[#allocation7 + $0x58] sm:$0xf]
        %v1110 = vld [vmem:[#allocation7 + $0x5c] sm:$0xf]
        %v1111 = vld [vmem:[#allocation7 + $0x60] sm:$0xf]
        %v1112 = vld [vmem:[#allocation7 + $0x64] sm:$0xf]
        %v1113 = vld [vmem:[#allocation7 + $0x68] sm:$0xf]
        %v1114 = vld [vmem:[#allocation7 + $0x6c] sm:$0xf]
        %v1115 = vld [vmem:[#allocation7 + $0x70] sm:$0xf]
        %v1116 = vld [vmem:[#allocation7 + $0x74] sm:$0xf]
        %v1117 = vld [vmem:[#allocation7 + $0x78] sm:$0xf]
        %v1118 = vld [vmem:[#allocation7 + $0x7c] sm:$0xf]
        %v1119 = vld [vmem:[%s4] sm:$0x1]
        %v1121 = vlaneseq
        %v1122 = vshrl.u32 %v1121, 7
        %v1123 = vsub.s32 0, %v1122
        %v1124 = vrot.slane %v1119, %v1123
        %v1158 = vunpack.c.l.b16 %v1087
        %v1159 = vunpack.c.l.b16 %v1088
        %v1160 = vunpack.c.l.b16 %v1089
        %v1161 = vunpack.c.l.b16 %v1090
        %v1162 = vunpack.c.l.b16 %v1091
        %v1163 = vunpack.c.l.b16 %v1092
        %v1164 = vunpack.c.l.b16 %v1093
        %v1165 = vunpack.c.l.b16 %v1094
        %v1166 = vunpack.c.l.b16 %v1095
        %v1167 = vunpack.c.l.b16 %v1096
        %v1168 = vunpack.c.l.b16 %v1097
        %v1169 = vunpack.c.l.b16 %v1098
        %v1170 = vunpack.c.l.b16 %v1099
        %v1171 = vunpack.c.l.b16 %v1100
        %v1172 = vunpack.c.l.b16 %v1101
        %v1173 = vunpack.c.l.b16 %v1102
        %v1174 = vunpack.c.l.b16 %v1103
        %v1175 = vunpack.c.l.b16 %v1104
        %v1176 = vunpack.c.l.b16 %v1105
        %v1177 = vunpack.c.l.b16 %v1106
        %v1178 = vunpack.c.l.b16 %v1107
        %v1179 = vunpack.c.l.b16 %v1108
        %v1180 = vunpack.c.l.b16 %v1109
        %v1181 = vunpack.c.l.b16 %v1110
        %v1182 = vunpack.c.l.b16 %v1111
        %v1183 = vunpack.c.l.b16 %v1112
        %v1184 = vunpack.c.l.b16 %v1113
        %v1185 = vunpack.c.l.b16 %v1114
        %v1186 = vunpack.c.l.b16 %v1115
        %v1187 = vunpack.c.l.b16 %v1116
        %v1188 = vunpack.c.l.b16 %v1117
        %v1189 = vunpack.c.l.b16 %v1118
        %v1190 = vpack.c.b16 %v1159, %v1158
        %v1191 = vpack.c.b16 %v1161, %v1160
        %v1192 = vpack.c.b16 %v1163, %v1162
        %v1193 = vpack.c.b16 %v1165, %v1164
        %v1194 = vpack.c.b16 %v1167, %v1166
        %v1195 = vpack.c.b16 %v1169, %v1168
        %v1196 = vpack.c.b16 %v1171, %v1170
        %v1197 = vpack.c.b16 %v1173, %v1172
        %v1198 = vpack.c.b16 %v1175, %v1174
        %v1199 = vpack.c.b16 %v1177, %v1176
        %v1200 = vpack.c.b16 %v1179, %v1178
        %v1201 = vpack.c.b16 %v1181, %v1180
        %v1202 = vpack.c.b16 %v1183, %v1182
        %v1203 = vpack.c.b16 %v1185, %v1184
        %v1204 = vpack.c.b16 %v1187, %v1186
        %v1205 = vpack.c.b16 %v1189, %v1188
        %1222 = vmatprep.subr.bf16.mxu0 0
        %1223 = vmatpush1.bf16.msra.mxu0 %v1197
        %1224 = vmatprep.subr.bf16.mxu0 0
        %1225 = vmatpush1.bf16.msra.mxu0 %v1196
        %1226 = vmatprep.subr.bf16.mxu0 0
        %1227 = vmatpush1.bf16.msra.mxu0 %v1195
        %1228 = vmatprep.subr.bf16.mxu0 0
        %1229 = vmatpush1.bf16.msra.mxu0 %v1194
        %1230 = vmatprep.subr.bf16.mxu0 0
        %1231 = vmatpush1.bf16.msra.mxu0 %v1193
        %1232 = vmatprep.subr.bf16.mxu0 0
        %1233 = vmatpush1.bf16.msra.mxu0 %v1192
        %1234 = vmatprep.subr.bf16.mxu0 0
        %1235 = vmatpush1.bf16.msra.mxu0 %v1191
        %1236 = vmatprep.subr.bf16.mxu0 0
        %1237 = vmatpush1.bf16.msra.mxu0 %v1190
        %1238 = vmatprep.subr.bf16.mxu0 0
        %1239 = vmatpush2.bf16.msra.mxu0 %v1205
        %1240 = vmatprep.subr.bf16.mxu0 0
        %1241 = vmatpush2.bf16.msra.mxu0 %v1204
        %1242 = vmatprep.subr.bf16.mxu0 0
        %1243 = vmatpush2.bf16.msra.mxu0 %v1203
        %1244 = vmatprep.subr.bf16.mxu0 0
        %1245 = vmatpush2.bf16.msra.mxu0 %v1202
        %1246 = vmatprep.subr.bf16.mxu0 0
        %1247 = vmatpush2.bf16.msra.mxu0 %v1201
        %1248 = vmatprep.subr.bf16.mxu0 0
        %1249 = vmatpush2.bf16.msra.mxu0 %v1200
        %1250 = vmatprep.subr.bf16.mxu0 0
        %1251 = vmatpush2.bf16.msra.mxu0 %v1199
        %1252 = vmatprep.subr.bf16.mxu0 0
        %1253 = vmatpush2.bf16.msra.mxu0 %v1198
        %1254 = vmatprep.mubr.bf16.mxu0 %v1084
        %1255 = vmatmul.mubr.bf16.gmra.mxu0 %v1083
        %v1256 = vpop.f32.mrf.mxu0
        %v1257 = vadd.f32 %v1124, %v1256
        %v1258 = vpop.f32.mrf.mxu0
        %v1259 = vpop.f32.mrf.mxu0
        %v1260 = vadd.f32 %v1124, %v1259
        %v1261 = vpop.f32.mrf.mxu0
        %1262 = vmatprep.mubr.bf16.mxu0 %v1086
        %1263 = vmatmul.mubr.bf16.gmra.mxu0 %v1085
        %v1264 = vpop.f32.mrf.mxu0
        %v1265 = vadd.f32 %v1124, %v1264
        %v1266 = vpop.f32.mrf.mxu0
        %v1267 = vpop.f32.mrf.mxu0
        %v1268 = vadd.f32 %v1124, %v1267
        %v1269 = vpop.f32.mrf.mxu0
        %1270 = vdwg.mxu0
        %v1271 = vpack.c.bf16 %v1260, %v1257
        %v1272 = vpack.c.bf16 %v1268, %v1265
        %v1275 = vunpack.c.l.b16 %v1271
        %v1276 = vunpack.c.h.b16 %v1271
        %v1277 = vunpack.c.l.b16 %v1272
        %v1278 = vunpack.c.h.b16 %v1272
        %v1279 = vpack.c.b16 %v1275, %v1275
        %v1280 = vpack.c.b16 %v1276, %v1276
        %v1281 = vpack.c.b16 %v1277, %v1277
        %v1282 = vpack.c.b16 %v1278, %v1278
        %1287 = vst [vmem:[%s272] sm:$0xf] %v1279
        %1288 = vst [vmem:[%s272 + $0x4] sm:$0xf] %v1280
        %1289 = vst [vmem:[%s272 + $0x8] sm:$0xf] %v1281
        %1290 = vst [vmem:[%s272 + $0xc] sm:$0xf] %v1282
        %s1291 = sand.u32 %s141, 1
        %s1292 = scalar_lea.sflag [#allocation4], %s1291
        %s1293 = sand.u32 %s141, 1
        %s1294 = smul.addr %s1293, 16
        %s1295 = scalar_lea.vmem [#allocation8], %s1294
        // Predicated region
        $region53: #{tpu_custom_call.1} parent=39 // pred_check
          %p1296 = pneg %p151
        $region54: #{tpu_custom_call.1} parent=39 // pred_check_branch
          %1298 = sbr.rel (%p1296) target = $region56
        $region55: #{tpu_custom_call.1} parent=39 // pred_region
          %s1299 = smul.u32 4, %s23
          %s1301 = ssub.s32 256, 256
          %1302 = vsyncadd %s1292, %s1301
          %s1303 = smul.addr %s1299, 64
          %s1304 = scalar_lea.hbm %s5, %s1303
          %s1305 = sshll.u32 %s1295, 4
          %s1306 = int_to_ptr.vmem [resolvable:$true] %s1305
          %1311 = dma.vmem_to_hbm [thread:$0]  %s1306, 256, %s1304, %s1292, 64, 64, 4
        $region56: #{tpu_custom_call.1} parent=39 // pred_fallthru
          _
      $region40: #{tpu_custom_call.1} parent=5 // pred_fallthru
        _
      %p1312 = scmp.le.s32.totalorder 2, %s18
      // Predicated region
      $region57: #{tpu_custom_call.1} parent=5 // pred_check
        %p1313 = pneg %p1312
      $region58: #{tpu_custom_call.1} parent=5 // pred_check_branch
        %1315 = sbr.rel (%p1313) target = $region60
      $region59: #{tpu_custom_call.1} parent=5 // pred_region
        %s1316 = ssub.s32 %s18, 2
        // Predicated region
        $region61: #{tpu_custom_call.1} parent=59 // pred_check
          %p1317 = pneg %p157
        $region62: #{tpu_custom_call.1} parent=59 // pred_check_branch
          %1319 = sbr.rel (%p1317) target = $region64
        $region63: #{tpu_custom_call.1} parent=59 // pred_region
          %s1320 = sand.u32 %s142, 1
          %s1321 = scalar_lea.sflag [#allocation4], %s1320
          %s1322 = sand.u32 %s142, 1
          %s1323 = smul.addr %s1322, 16
          %s1324 = scalar_lea.vmem [#allocation8], %s1323
          %1325 = dma.done %s1321, 256
        $region64: #{tpu_custom_call.1} parent=59 // pred_fallthru
          _
      $region60: #{tpu_custom_call.1} parent=5 // pred_fallthru
        _
    $region6: #{tpu_custom_call.1} parent=1 // loop_footer
      %s22 = sadd.s32 1, %s18
    $region7: #{tpu_custom_call.1} parent=1 // loop_footer_branch
      %17 = sbr.rel target = $region3
    $region8: #{tpu_custom_call.1} parent=1 // loop_exit
      _
    %1326 = vsyncpa [#allocation3], 1
    %s1327 = scalar_lea.sflag [#allocation3], 1
    %1328 = vsyncpa %s1327, 1
    %1329 = vsyncpa [#allocation6], 1
    %1330 = vsyncpa [#allocation4], 1
    %s1331 = scalar_lea.sflag [#allocation4], 1
    %1332 = vsyncpa %s1331, 1

</llo_original>
